<compile_context>
chip_gen: v7x
topology: tpu7x:2x2x1
jax: 0.10.0
libtpu: 0.0.40
codegen_flags: <defaults>
</compile_context>

<pallas_src>
import functools

import jax
import jax.numpy as jnp
import numpy as np
from jax.experimental import pallas as pl
from jax.experimental.pallas import tpu as pltpu


# ----------------------------- Pallas kernels ------------------------------


def _conv_stats_kernel(xcol_ref, w_ref, stats_ref):
    """Pass 1: conv-as-matmul kept in VMEM (y never written to HBM) plus
    per-tile partial BatchNorm statistics.

    xcol_ref : (1, K, T)        K = C_in*k*k on sublanes, spatial tile T on lanes
    w_ref    : (C_out, K)       constant index_map -> stays resident in VMEM
    stats_ref: (1, 1, C_out, 2) lane 0 = sum(y), lane 1 = sum(y*y) over the tile
    """
    xt = xcol_ref[0]                                                   # (K, T)
    y = jnp.dot(w_ref[...], xt, preferred_element_type=jnp.float32)   # (C_out, T)
    s1 = jnp.sum(y, axis=-1, keepdims=True)                           # (C_out, 1)
    s2 = jnp.sum(y * y, axis=-1, keepdims=True)                       # (C_out, 1)
    stats_ref[0, 0] = jnp.concatenate([s1, s2], axis=-1)              # (C_out, 2)


def _conv_bn_kernel(xcol_ref, ws_ref, shift_ref, o_ref):
    """Pass 2: fused conv + BatchNorm.  Per-channel scale is folded into the
    weights (W' = diag(scale) @ W); shift applied as a per-channel bias.
    Reads x, writes the final output — no intermediate y in HBM.

    xcol_ref : (1, K, T);  ws_ref: (C_out, K);  shift_ref: (C_out, 1)
    o_ref    : (1, C_out, T)   lane-dense output tile
    """
    xt = xcol_ref[0]                                                   # (K, T)
    y = jnp.dot(ws_ref[...], xt, preferred_element_type=jnp.float32)  # (C_out, T)
    o_ref[0] = y + shift_ref[...]                  # (C_out, 1) lane-broadcast


# ------------------------------- glue (JAX) --------------------------------


def _pick_spatial_tile(S, n_images, max_lanes):
    """Largest multiple of 128 dividing S (capped at max_lanes), while keeping
    at least 2 total grid steps so both v7x TensorCores get work.  If S is not
    128-aligned, fall back to a single full-S tile (block == full dim)."""
    if S % 128 != 0:
        return S
    cands = [t for t in range(128, S + 1, 128) if S % t == 0 and t <= max_lanes]
    if not cands:
        return 128
    for t in reversed(cands):                       # largest first
        if n_images * (S // t) >= 2:
            return t
    return cands[-1]


def _patches_kc_first(x, k, s, p):
    """k>1 / strided / padded path: build patches in (N, C*k*k, OH*OW) order
    (channel-kernel first, spatial last).  Feature order matches PyTorch's
    weight.reshape(C_out, C_in*k*k), i.e. (c, kh, kw)."""
    # TODO(synk): fold the patch gather into the kernel (row-offset index_map /
    # manual DMA) instead of materializing the k^2-expanded tensor in HBM.
    N, C, H, W = x.shape
    xp = jnp.pad(x, ((0, 0), (0, 0), (p, p), (p, p)))
    OH = (H + 2 * p - k) // s + 1
    OW = (W + 2 * p - k) // s + 1
    cols = []
    for ki in range(k):
        for kj in range(k):
            cols.append(xp[:, :, ki:ki + s * OH:s, kj:kj + s * OW:s])
    patches = jnp.stack(cols, axis=2)                  # (N, C, k*k, OH, OW)
    return patches.reshape(N, C * k * k, OH * OW), OH, OW


@functools.partial(jax.jit, static_argnames=("k", "s", "p", "g", "eps"))
def conv_bn_forward(x, weight, gamma, beta, *, k=1, s=1, p=0, g=1, eps=1e-5):
    assert g == 1  # TODO(synk): grouped conv (g > 1) not implemented in the kernel
    N, C_in, H, W = x.shape
    C_out = weight.shape[0]
    K = C_in * k * k

    # x is streamed in its incoming dtype (pass bf16 to halve input HBM traffic);
    # accumulation inside the kernels is f32 regardless.
    if k == 1 and s == 1 and p == 0:
        # No im2col needed: conv input is x in (N, C_in, H*W) layout (free reshape).
        xcol3 = x.reshape(N, C_in, H * W)
        OH, OW = H, W
    else:
        xcol3, OH, OW = _patches_kc_first(x, k, s, p)

    S = OH * OW
    M = N * S

    # Tile budget: double-buffered (x block + out block) in f32, keep well under
    # v5e's 16 MiB scoped-VMEM default (also fine for v7x's 64 MiB physical).
    vmem_budget = 8 * 1024 * 1024
    max_lanes = (vmem_budget // (8 * (K + C_out))) // 128 * 128
    max_lanes = int(max(128, min(16384, max_lanes)))

    tile_s = _pick_spatial_tile(S, N, max_lanes)
    num_tiles = S // tile_s
    grid = (N, num_tiles)

    w2 = weight.reshape(C_out, K).astype(jnp.float32)               # (C_out, K)

    # ---- Pass 1: stats only (conv tile lives in VMEM, never hits HBM) ----
    stats = pl.pallas_call(
        _conv_stats_kernel,
        out_shape=jax.ShapeDtypeStruct((N, num_tiles, C_out, 2), jnp.float32),
        grid=grid,
        in_specs=[pl.BlockSpec((1, K, tile_s), lambda n, j: (n, 0, j)),
                  pl.BlockSpec((C_out, K), lambda n, j: (0, 0))],
        out_specs=pl.BlockSpec((1, 1, C_out, 2), lambda n, j: (n, j, 0, 0)),
        compiler_params=pltpu.CompilerParams(
            dimension_semantics=("parallel", "parallel")),
    )(xcol3, w2)

    # Tiny per-channel scalar math (C_out elements) in plain JAX.
    sum_c = jnp.sum(stats[..., 0], axis=(0, 1))                     # (C_out,)
    sq_c = jnp.sum(stats[..., 1], axis=(0, 1))                      # (C_out,)
    mean = sum_c / M
    var = jnp.maximum(sq_c / M - mean * mean, 0.0)   # biased var, clamped >= 0
    scale = gamma.astype(jnp.float32) * jax.lax.rsqrt(var + eps)
    shift = beta.astype(jnp.float32) - mean * scale
    w_scaled = w2 * scale[:, None]                                  # (C_out, K)
    shift2 = shift.reshape(C_out, 1)

    # ---- Pass 2: fused conv + BN (reads x again, writes final output) ----
    out = pl.pallas_call(
        _conv_bn_kernel,
        out_shape=jax.ShapeDtypeStruct((N, C_out, S), jnp.float32),
        grid=grid,
        in_specs=[pl.BlockSpec((1, K, tile_s), lambda n, j: (n, 0, j)),
                  pl.BlockSpec((C_out, K), lambda n, j: (0, 0)),
                  pl.BlockSpec((C_out, 1), lambda n, j: (0, 0))],
        out_specs=pl.BlockSpec((1, C_out, tile_s), lambda n, j: (n, 0, j)),
        compiler_params=pltpu.CompilerParams(
            dimension_semantics=("parallel", "parallel")),
    )(xcol3, w_scaled, shift2)

    return out.reshape(N, C_out, OH, OW)             # free reshape, already NCHW


def _reference(x, weight, gamma, beta, *, k=1, s=1, p=0, eps=1e-5):
    y = jax.lax.conv_general_dilated(
        x.astype(jnp.float32), weight.astype(jnp.float32),
        window_strides=(s, s), padding=((p, p), (p, p)),
        dimension_numbers=("NCHW", "OIHW", "NCHW"))
    mean = y.mean(axis=(0, 2, 3), keepdims=True)
    var = ((y - mean) ** 2).mean(axis=(0, 2, 3), keepdims=True)   # biased
    yhat = (y - mean) * jax.lax.rsqrt(var + eps)
    return yhat * gamma[None, :, None, None] + beta[None, :, None, None]


if __name__ == "__main__":
    # Module config: Conv(in_ch=4, out_ch=8) with defaults k=1, s=1, p=0, g=1.
    in_ch, out_ch, k, s, p, g = 4, 8, 1, 1, 0, 1
    key = jax.random.PRNGKey(0)
    kx, kw, kg, kb = jax.random.split(key, 4)

    x = jax.random.normal(kx, (2, in_ch, 16, 16), dtype=jnp.float32)
    weight = 0.1 * jax.random.normal(kw, (out_ch, in_ch // g, k, k),
                                     dtype=jnp.float32)   # Conv2d weight, no bias
    gamma = 1.0 + 0.1 * jax.random.normal(kg, (out_ch,), dtype=jnp.float32)
    beta = 0.1 * jax.random.normal(kb, (out_ch,), dtype=jnp.float32)

    out = conv_bn_forward(x, weight, gamma, beta, k=k, s=s, p=p, g=g)
    out = jax.block_until_ready(out)

    ref = _reference(x, weight, gamma, beta, k=k, s=s, p=p)
    np.testing.assert_allclose(np.asarray(out), np.asarray(ref),
                               rtol=1e-4, atol=1e-4)
    print("KERNEL_OK")
</pallas_src>

<mosaic_0001>
module attributes {stable_mosaic.version = 11 : i64} {
  func.func @_conv_stats_kernel(%arg0: i32, %arg1: i32, %arg2: memref<1x4x256xf32, #tpu.memory_space<vmem>>, %arg3: memref<8x4xf32, #tpu.memory_space<vmem>>, %arg4: memref<1x1x8x2xf32, #tpu.memory_space<vmem>>) attributes {dimension_semantics = [#tpu.dimension_semantics<parallel>, #tpu.dimension_semantics<parallel>], iteration_bounds = array<i64: 2, 1>, scalar_prefetch = 0 : i64, scratch_operands = 0 : i64, tpu.core_type = #tpu.core_type<tc>, window_params = [{transform_indices = @transform_0, window_bounds = array<i64: 1, 4, 256>}, {pipeline_mode = #tpu.pipeline_mode<synchronous>, transform_indices = @transform_1, window_bounds = array<i64: 8, 4>}, {transform_indices = @transform_2, window_bounds = array<i64: 1, 1, 8, 2>}]} {
    %c0 = arith.constant 0 : index
    %c0_0 = arith.constant 0 : index
    %c0_1 = arith.constant 0 : index
    %0 = vector.load %arg2[%c0, %c0_0, %c0_1] : memref<1x4x256xf32, #tpu.memory_space<vmem>>, vector<1x4x256xf32>
    %1 = vector.shape_cast %0 : vector<1x4x256xf32> to vector<4x256xf32>
    %c0_2 = arith.constant 0 : index
    %c0_3 = arith.constant 0 : index
    %2 = vector.load %arg3[%c0_2, %c0_3] : memref<8x4xf32, #tpu.memory_space<vmem>>, vector<8x4xf32>
    %cst = arith.constant dense<0.000000e+00> : vector<8x256xf32>
    %3 = tpu.matmul %2, %1, %cst {dimension_numbers = #tpu.dot_dimension_numbers<[1], [0], [0], [1], [0, 0, 1, 1], [], []>} : vector<8x4xf32>, vector<4x256xf32>, vector<8x256xf32> -> vector<8x256xf32>
    %cst_4 = arith.constant dense<0.000000e+00> : vector<8xf32>
    %4 = vector.multi_reduction <add>, %3, %cst_4 [1] : vector<8x256xf32> to vector<8xf32>
    %5 = vector.shape_cast %4 : vector<8xf32> to vector<8x1xf32>
    %6 = arith.mulf %3, %3 : vector<8x256xf32>
    %cst_5 = arith.constant dense<0.000000e+00> : vector<8xf32>
    %7 = vector.multi_reduction <add>, %6, %cst_5 [1] : vector<8x256xf32> to vector<8xf32>
    %8 = vector.shape_cast %7 : vector<8xf32> to vector<8x1xf32>
    %9 = tpu.concatenate %5, %8 in 1 : vector<8x1xf32>, vector<8x1xf32> -> vector<8x2xf32>
    %c0_6 = arith.constant 0 : index
    %c0_7 = arith.constant 0 : index
    %c0_8 = arith.constant 0 : index
    %c0_9 = arith.constant 0 : index
    %10 = vector.load %arg4[%c0_6, %c0_7, %c0_8, %c0_9] : memref<1x1x8x2xf32, #tpu.memory_space<vmem>>, vector<1x1x8x2xf32>
    %11 = vector.shape_cast %10 : vector<1x1x8x2xf32> to vector<8x2xf32>
    %12 = vector.shape_cast %9 : vector<8x2xf32> to vector<1x1x8x2xf32>
    tpu.vector_store %arg4[%c0_6, %c0_7, %c0_8, %c0_9], %12 {strides = array<i32>} : memref<1x1x8x2xf32, #tpu.memory_space<vmem>>, vector<1x1x8x2xf32>,
    return
  }
  func.func @transform_0(%arg0: i32, %arg1: i32) -> (i32, i32, i32) {
    %c0_i32 = arith.constant 0 : i32
    %c0_i32_0 = arith.constant 0 : i32
    return %arg0, %c0_i32, %arg1 : i32, i32, i32
  }
  func.func @transform_1(%arg0: i32, %arg1: i32) -> (i32, i32) {
    %c0_i32 = arith.constant 0 : i32
    %c0_i32_0 = arith.constant 0 : i32
    %c0_i32_1 = arith.constant 0 : i32
    return %c0_i32, %c0_i32_0 : i32, i32
  }
  func.func @transform_2(%arg0: i32, %arg1: i32) -> (i32, i32, i32, i32) {
    %c0_i32 = arith.constant 0 : i32
    %c0_i32_0 = arith.constant 0 : i32
    %c0_i32_1 = arith.constant 0 : i32
    return %arg0, %arg1, %c0_i32, %c0_i32_0 : i32, i32, i32, i32
  }
}

module attributes {stable_mosaic.version = 11 : i64} {
  func.func @_conv_bn_kernel(%arg0: i32, %arg1: i32, %arg2: memref<1x4x256xf32, #tpu.memory_space<vmem>>, %arg3: memref<8x4xf32, #tpu.memory_space<vmem>>, %arg4: memref<8x1xf32, #tpu.memory_space<vmem>>, %arg5: memref<1x8x256xf32, #tpu.memory_space<vmem>>) attributes {dimension_semantics = [#tpu.dimension_semantics<parallel>, #tpu.dimension_semantics<parallel>], iteration_bounds = array<i64: 2, 1>, scalar_prefetch = 0 : i64, scratch_operands = 0 : i64, tpu.core_type = #tpu.core_type<tc>, window_params = [{transform_indices = @transform_0, window_bounds = array<i64: 1, 4, 256>}, {pipeline_mode = #tpu.pipeline_mode<synchronous>, transform_indices = @transform_1, window_bounds = array<i64: 8, 4>}, {pipeline_mode = #tpu.pipeline_mode<synchronous>, transform_indices = @transform_2, window_bounds = array<i64: 8, 1>}, {transform_indices = @transform_3, window_bounds = array<i64: 1, 8, 256>}]} {
    %c0 = arith.constant 0 : index
    %c0_0 = arith.constant 0 : index
    %c0_1 = arith.constant 0 : index
    %0 = vector.load %arg2[%c0, %c0_0, %c0_1] : memref<1x4x256xf32, #tpu.memory_space<vmem>>, vector<1x4x256xf32>
    %1 = vector.shape_cast %0 : vector<1x4x256xf32> to vector<4x256xf32>
    %c0_2 = arith.constant 0 : index
    %c0_3 = arith.constant 0 : index
    %2 = vector.load %arg3[%c0_2, %c0_3] : memref<8x4xf32, #tpu.memory_space<vmem>>, vector<8x4xf32>
    %cst = arith.constant dense<0.000000e+00> : vector<8x256xf32>
    %3 = tpu.matmul %2, %1, %cst {dimension_numbers = #tpu.dot_dimension_numbers<[1], [0], [0], [1], [0, 0, 1, 1], [], []>} : vector<8x4xf32>, vector<4x256xf32>, vector<8x256xf32> -> vector<8x256xf32>
    %c0_4 = arith.constant 0 : index
    %c0_5 = arith.constant 0 : index
    %4 = vector.load %arg4[%c0_4, %c0_5] : memref<8x1xf32, #tpu.memory_space<vmem>>, vector<8x1xf32>
    %5 = vector.broadcast %4 : vector<8x1xf32> to vector<8x256xf32>
    %6 = arith.addf %3, %5 : vector<8x256xf32>
    %c0_6 = arith.constant 0 : index
    %c0_7 = arith.constant 0 : index
    %c0_8 = arith.constant 0 : index
    %7 = vector.load %arg5[%c0_6, %c0_7, %c0_8] : memref<1x8x256xf32, #tpu.memory_space<vmem>>, vector<1x8x256xf32>
    %8 = vector.shape_cast %7 : vector<1x8x256xf32> to vector<8x256xf32>
    %9 = vector.shape_cast %6 : vector<8x256xf32> to vector<1x8x256xf32>
    tpu.vector_store %arg5[%c0_6, %c0_7, %c0_8], %9 {strides = array<i32>} : memref<1x8x256xf32, #tpu.memory_space<vmem>>, vector<1x8x256xf32>,
    return
  }
  func.func @transform_0(%arg0: i32, %arg1: i32) -> (i32, i32, i32) {
    %c0_i32 = arith.constant 0 : i32
    %c0_i32_0 = arith.constant 0 : i32
    return %arg0, %c0_i32, %arg1 : i32, i32, i32
  }
  func.func @transform_1(%arg0: i32, %arg1: i32) -> (i32, i32) {
    %c0_i32 = arith.constant 0 : i32
    %c0_i32_0 = arith.constant 0 : i32
    %c0_i32_1 = arith.constant 0 : i32
    return %c0_i32, %c0_i32_0 : i32, i32
  }
  func.func @transform_2(%arg0: i32, %arg1: i32) -> (i32, i32) {
    %c0_i32 = arith.constant 0 : i32
    %c0_i32_0 = arith.constant 0 : i32
    %c0_i32_1 = arith.constant 0 : i32
    return %c0_i32, %c0_i32_0 : i32, i32
  }
  func.func @transform_3(%arg0: i32, %arg1: i32) -> (i32, i32, i32) {
    %c0_i32 = arith.constant 0 : i32
    %c0_i32_0 = arith.constant 0 : i32
    return %arg0, %c0_i32, %arg1 : i32, i32, i32
  }
}

</mosaic_0001>

<llo_original>
// kernel: conv_bn_forward.2
$region0: #{conv_bn_forward.2}
  #allocation0 [shape = 'u32[]', space=smem, size = 0x4, offset = 0x4, fixed_abs, tag = 'smem constant byte address 0x4 - core index']
  #allocation1 [shape = 'u32[144,128]{1,0:T(1,128)}', space=vmem, size = 0x12000, scoped, tag = 'internal scratch']
  %s0 = inlined_call_operand.vmem [shape: f32[2,4,256], index: 0, kind: input, shape index: {}]
  %s1 = inlined_call_operand.vmem [shape: f32[8,4], index: 1, kind: input, shape index: {}]
  %s2 = inlined_call_operand.vmem [shape: f32[2,1,8,2], index: 2, kind: output, shape index: {}]
  %s3 = sld [smem:[#allocation0]]
  $region41: #{conv_bn_forward.2} parent=0
    _
  %s5 = ssub.s32 1, %s3
  %s6 = scalar_select 0, %s5, %s3
  loop: start=0, step=1, limit=4
  $region2: #{conv_bn_forward.2} parent=0 // loop_pre_header
    _
  $region3: #{conv_bn_forward.2} parent=0 // loop_header
    %s8 = sphi 0, %s12
    %p9 = scmp.ge.s32.totalorder %s8, 4
    %s15 = sphi 0, %s27
    %s16 = sphi 0, %s23
    %s17 = sphi 0, %s15
    %s18 = sphi 0, %s16
    %s19 = sphi 0, %s17
    %s20 = sphi 0, %s18
    %s32 = sphi 0, %s34
    %s35 = sphi 0, %s32
    %s36 = sphi 0, %s35
    %s52 = sphi 0, %s36
    %s56 = sphi 0, %s56
    %s58 = sphi 0, %s56
    %s59 = sphi 0, %s58
    %s73 = sphi 0, %s59
    %s81 = sphi 0, %s83
    %s84 = sphi 0, %s81
    %s85 = sphi 0, %s84
    %s101 = sphi 0, %s85
  $region4: #{conv_bn_forward.2} parent=0 // loop_header_branch
    %11 = sbr.rel (%p9) target = $region8
  $region5: #{conv_bn_forward.2} parent=0 // loop_body
    %s13 = ssub.s32 %s8, 1
    %s14 = ssub.s32 %s8, 2
    %s21 = sadd.s32 1, %s16
    %p22 = scmp.ge.s32.totalorder %s21, 1
    %s23 = scalar_select %p22, 0, %s21
    %s24 = sadd.s32 1, %s15
    %s25 = scalar_select %p22, %s24, %s15
    %p26 = scmp.ge.s32.totalorder %s25, 2
    %s27 = scalar_select %p26, 0, %s25
    %s28 = ssub.s32 %s15, %s27
    %s29 = ssub.s32 %s16, %s23
    %s30 = sor.u32 %s28, %s29
    %p31 = scmp.eq.s32.totalorder %s30, 0
    %s33 = sadd.s32 %s32, 1
    %s34 = scalar_select %p31, %s32, %s33
    %p37 = pneg %p31
    %p38 = scmp.eq.s32.totalorder %s8, 1
    %p39 = por %p37, %p38
    %p40 = scmp.ne.s32.totalorder %s32, %s35
    %p41 = scmp.eq.s32.totalorder %s8, 0
    %p42 = por %p40, %p41
    %p43 = scmp.ne.s32.totalorder %s32, %s35
    %p44 = scmp.eq.s32.totalorder %s13, 1
    %p45 = por %p43, %p44
    %p46 = scmp.ne.s32.totalorder %s35, %s36
    %p47 = scmp.eq.s32.totalorder %s13, 0
    %p48 = por %p46, %p47
    %p49 = scmp.ne.s32.totalorder %s35, %s36
    %p50 = scmp.eq.s32.totalorder %s14, 1
    %p51 = por %p49, %p50
    %p53 = scmp.ne.s32.totalorder %s36, %s52
    %p54 = scmp.eq.s32.totalorder %s14, 0
    %p55 = por %p53, %p54
    %s57 = sadd.s32 %s56, 1
    %p60 = scmp.eq.s32.totalorder %s8, 1
    %p61 = scmp.ne.s32.totalorder %s56, %s58
    %p62 = scmp.eq.s32.totalorder %s8, 0
    %p63 = por %p61, %p62
    %p64 = scmp.ne.s32.totalorder %s56, %s58
    %p65 = scmp.eq.s32.totalorder %s13, 1
    %p66 = por %p64, %p65
    %p67 = scmp.ne.s32.totalorder %s58, %s59
    %p68 = scmp.eq.s32.totalorder %s13, 0
    %p69 = por %p67, %p68
    %p70 = scmp.ne.s32.totalorder %s58, %s59
    %p71 = scmp.eq.s32.totalorder %s14, 1
    %p72 = por %p70, %p71
    %p74 = scmp.ne.s32.totalorder %s59, %s73
    %p75 = scmp.eq.s32.totalorder %s14, 0
    %p76 = por %p74, %p75
    %s77 = ssub.s32 %s15, %s27
    %s78 = ssub.s32 %s16, %s23
    %s79 = sor.u32 %s77, %s78
    %p80 = scmp.eq.s32.totalorder %s79, 0
    %s82 = sadd.s32 %s81, 1
    %s83 = scalar_select %p80, %s81, %s82
    %p86 = pneg %p80
    %p87 = scmp.eq.s32.totalorder %s8, 1
    %p88 = por %p86, %p87
    %p89 = scmp.ne.s32.totalorder %s81, %s84
    %p90 = scmp.eq.s32.totalorder %s8, 0
    %p91 = por %p89, %p90
    %p92 = scmp.ne.s32.totalorder %s81, %s84
    %p93 = scmp.eq.s32.totalorder %s13, 1
    %p94 = por %p92, %p93
    %p95 = scmp.ne.s32.totalorder %s84, %s85
    %p96 = scmp.eq.s32.totalorder %s13, 0
    %p97 = por %p95, %p96
    %p98 = scmp.ne.s32.totalorder %s84, %s85
    %p99 = scmp.eq.s32.totalorder %s14, 1
    %p100 = por %p98, %p99
    %p102 = scmp.ne.s32.totalorder %s85, %s101
    %p103 = scmp.eq.s32.totalorder %s14, 0
    %p104 = por %p102, %p103
    %p105 = scmp.le.s32.totalorder 1, %s8
    %p106 = scmp.lt.s32.totalorder %s8, 3
    %p107 = pnand %p105, %p106
    %p108 = pneg %p107
    // Predicated region
    $region9: #{conv_bn_forward.2} parent=5 // pred_check
      _
    $region10: #{conv_bn_forward.2} parent=5 // pred_check_branch
      %110 = sbr.rel (%p107) target = $region12
    $region11: #{conv_bn_forward.2} parent=5 // pred_region
      %s111 = ssub.s32 %s8, 1
      // Predicated region
      $region13: #{conv_bn_forward.2} parent=11 // pred_check
        %p112 = pneg %p69
      $region14: #{conv_bn_forward.2} parent=11 // pred_check_branch
        %114 = sbr.rel (%p112) target = $region16
      $region15: #{conv_bn_forward.2} parent=11 // pred_region
        _
      $region16: #{conv_bn_forward.2} parent=11 // pred_fallthru
        _
    $region12: #{conv_bn_forward.2} parent=5 // pred_fallthru
      _
    %p115 = scmp.lt.s32.totalorder %s8, 2
    // Predicated region
    $region17: #{conv_bn_forward.2} parent=5 // pred_check
      %p116 = pneg %p115
    $region18: #{conv_bn_forward.2} parent=5 // pred_check_branch
      %118 = sbr.rel (%p116) target = $region20
    $region19: #{conv_bn_forward.2} parent=5 // pred_region
      // Predicated region
      $region21: #{conv_bn_forward.2} parent=19 // pred_check
        %p119 = pneg %p42
      $region22: #{conv_bn_forward.2} parent=19 // pred_check_branch
        %121 = sbr.rel (%p119) target = $region24
      $region23: #{conv_bn_forward.2} parent=19 // pred_region
        %s122 = smul.u32 2, %s16
        %p123 = scmp.lt.s32.totalorder %s15, 1
        %s124 = scalar_select %p123, %s15, 1
        %p125 = scmp.lt.s32.totalorder %s122, 1
        %s126 = scalar_select %p125, %s122, 1
        %s127 = smul.addr %s124, 2
        %s128 = sadd.s32 %s126, %s127
        %s129 = smul.addr %s128, 4
        %s130 = scalar_lea.vmem %s0, %s129
        %s131 = smul.u32 2, %s16
      $region24: #{conv_bn_forward.2} parent=19 // pred_fallthru
        _
    $region20: #{conv_bn_forward.2} parent=5 // pred_fallthru
      _
    %p132 = scmp.le.s32.totalorder 1, %s8
    %p133 = scmp.lt.s32.totalorder %s8, 3
    %p134 = pnand %p132, %p133
    %p135 = pneg %p134
    // Predicated region
    $region25: #{conv_bn_forward.2} parent=5 // pred_check
      _
    $region26: #{conv_bn_forward.2} parent=5 // pred_check_branch
      %137 = sbr.rel (%p134) target = $region28
    $region27: #{conv_bn_forward.2} parent=5 // pred_region
      %s138 = ssub.s32 %s8, 1
      %s139 = smul.u32 2, %s18
      %p140 = scmp.lt.s32.totalorder %s17, 1
      %s141 = scalar_select %p140, %s17, 1
      %p142 = scmp.lt.s32.totalorder %s139, 1
      %s143 = scalar_select %p142, %s139, 1
      %s144 = smul.addr %s141, 2
      %s145 = sadd.s32 %s143, %s144
      %s146 = smul.addr %s145, 4
      %s147 = scalar_lea.vmem %s0, %s146
      %p148 = pneg %p48
      %p149 = pneg %p45
      %p150 = pneg %p69
      %p151 = pneg %p66
      %p152 = pneg %p97
      %p153 = pneg %p94
      %p154 = scmp.lt.s32.totalorder %s17, 1
      %s155 = scalar_select %p154, %s17, 1
      %p156 = scmp.lt.s32.totalorder %s18, 0
      %s157 = scalar_select %p156, %s18, 0
      %s158 = sadd.s32 %s157, %s155
      %s159 = smul.addr %s158, 8
      %s160 = scalar_lea.vmem %s2, %s159
      %s161 = smul.u32 2, %s18
      %p162 = scmp.lt.s32.totalorder %s17, 1
      %s163 = scalar_select %p162, %s17, 1
      %p164 = scmp.lt.s32.totalorder %s161, 1
      %s165 = scalar_select %p164, %s161, 1
      %s166 = smul.addr %s163, 2
      %s167 = sadd.s32 %s165, %s166
      %s168 = smul.addr %s167, 4
      %s169 = scalar_lea.vmem %s0, %s168
      %s170 = smul.u32 2, %s18
      %p171 = scmp.lt.s32.totalorder %s17, 1
      %s172 = scalar_select %p171, %s17, 1
      %p173 = scmp.lt.s32.totalorder %s18, 0
      %s174 = scalar_select %p173, %s18, 0
      %s175 = sadd.s32 %s174, %s172
      %s176 = smul.addr %s175, 8
      %s177 = scalar_lea.vmem %s2, %s176
      %v178 = vld [vmem:[%s169] sm:$0xff]
      %v179 = vld [vmem:[%s1] sm:$0xff]
      %v181 = vcombine.high %v178, %v178
      %vm182 = vcmask 31744
      %v184 = vsel %vm182, %v179, 0
      %vm186 = vcmask 1043456
      %v187 = vsel %vm186, %v178, 0
      %v189 = vsel %vm186, %v181, 0
      %191 = vmatprep.subr.mxu0 %v189
      %192 = vmatpush1.msra.mxu0 %v187
      %193 = vmatprep.subr.mxu0 0.0
      %194 = vmatpush1.msra.mxu0 0.0
      %195 = vmatprep.subr.mxu0 0.0
      %196 = vmatpush1.msra.mxu0 0.0
      %197 = vmatprep.subr.mxu0 0.0
      %198 = vmatpush1.msra.mxu0 0.0
      %199 = vmatprep.subr.mxu0 0.0
      %200 = vmatpush1.msra.mxu0 0.0
      %201 = vmatprep.subr.mxu0 0.0
      %202 = vmatpush1.msra.mxu0 0.0
      %203 = vmatprep.subr.mxu0 0.0
      %204 = vmatpush1.msra.mxu0 0.0
      %205 = vmatprep.subr.mxu0 0.0
      %206 = vmatpush1.msra.mxu0 0.0
      %207 = vmatprep.subr.mxu0 0.0
      %208 = vmatpush1.msra.mxu0 0.0
      %209 = vmatprep.subr.mxu0 0.0
      %210 = vmatpush1.msra.mxu0 0.0
      %211 = vmatprep.subr.mxu0 0.0
      %212 = vmatpush1.msra.mxu0 0.0
      %213 = vmatprep.subr.mxu0 0.0
      %214 = vmatpush1.msra.mxu0 0.0
      %215 = vmatprep.subr.mxu0 0.0
      %216 = vmatpush1.msra.mxu0 0.0
      %217 = vmatprep.subr.mxu0 0.0
      %218 = vmatpush1.msra.mxu0 0.0
      %219 = vmatprep.subr.mxu0 0.0
      %220 = vmatpush1.msra.mxu0 0.0
      %221 = vmatprep.subr.mxu0 0.0
      %222 = vmatpush1.msra.mxu0 0.0
      %223 = vmatprep.subr.mxu0 0.0
      %224 = vmatpush1.msra.mxu0 0.0
      %225 = vmatprep.subr.mxu0 0.0
      %226 = vmatpush1.msra.mxu0 0.0
      %227 = vmatprep.subr.mxu0 0.0
      %228 = vmatpush1.msra.mxu0 0.0
      %229 = vmatprep.subr.mxu0 0.0
      %230 = vmatpush1.msra.mxu0 0.0
      %231 = vmatprep.subr.mxu0 0.0
      %232 = vmatpush1.msra.mxu0 0.0
      %233 = vmatprep.subr.mxu0 0.0
      %234 = vmatpush1.msra.mxu0 0.0
      %235 = vmatprep.subr.mxu0 0.0
      %236 = vmatpush1.msra.mxu0 0.0
      %237 = vmatprep.subr.mxu0 0.0
      %238 = vmatpush1.msra.mxu0 0.0
      %239 = vmatprep.subr.mxu0 0.0
      %240 = vmatpush1.msra.mxu0 0.0
      %241 = vmatprep.subr.mxu0 0.0
      %242 = vmatpush1.msra.mxu0 0.0
      %243 = vmatprep.subr.mxu0 0.0
      %244 = vmatpush1.msra.mxu0 0.0
      %245 = vmatprep.subr.mxu0 0.0
      %246 = vmatpush1.msra.mxu0 0.0
      %247 = vmatprep.subr.mxu0 0.0
      %248 = vmatpush1.msra.mxu0 0.0
      %249 = vmatprep.subr.mxu0 0.0
      %250 = vmatpush1.msra.mxu0 0.0
      %251 = vmatprep.subr.mxu0 0.0
      %252 = vmatpush1.msra.mxu0 0.0
      %253 = vmatprep.subr.mxu0 0.0
      %254 = vmatpush1.msra.mxu0 0.0
      %255 = vmatprep.mubr.f32.mxu0 0.0
      %256 = vmatmul.mubr.f32.gmra.mrb[0].mxu0 %v184
      %v257 = vpop.f32.mrb[0].mxu0
      %v258 = vadd.f32 0.0, %v257
      %v259 = vpop.f32.mrb[0].mxu0
      %v260 = vadd.f32 0.0, %v259
      %261 = vdwg.mxu0
      %v262 = vadd.f32 %v258, %v260
      %263 = vadd.xlane.f32.xlu0 %v262
      %v264 = vpop.xlane.xlu0 %263
      %v265 = vmul.f32 %v258, %v258
      %v266 = vmul.f32 %v260, %v260
      %v267 = vadd.f32 %v265, %v266
      %268 = vadd.xlane.f32.xlu0 %v267
      %v269 = vpop.xlane.xlu0 %268
      %vm270 = vcmask 7168
      %v271 = vsel %vm270, %v264, %v269
      %vm272 = vcmask 15360
      %273 = vst.msk [vmem:[%s177] sm:$0xff] %vm272, %v271
      %p274 = scmp.lt.s32.totalorder %s17, 1
      %s275 = scalar_select %p274, %s17, 1
      %p276 = scmp.lt.s32.totalorder %s18, 0
      %s277 = scalar_select %p276, %s18, 0
      %s278 = sadd.s32 %s277, %s275
      %s279 = smul.addr %s278, 8
      %s280 = scalar_lea.vmem %s2, %s279
      // Predicated region
      $region29: #{conv_bn_forward.2} parent=27 // pred_check
        %p281 = pneg %p94
      $region30: #{conv_bn_forward.2} parent=27 // pred_check_branch
        %283 = sbr.rel (%p281) target = $region32
      $region31: #{conv_bn_forward.2} parent=27 // pred_region
        _
      $region32: #{conv_bn_forward.2} parent=27 // pred_fallthru
        _
    $region28: #{conv_bn_forward.2} parent=5 // pred_fallthru
      _
    %p284 = scmp.le.s32.totalorder 2, %s8
    // Predicated region
    $region33: #{conv_bn_forward.2} parent=5 // pred_check
      %p285 = pneg %p284
    $region34: #{conv_bn_forward.2} parent=5 // pred_check_branch
      %287 = sbr.rel (%p285) target = $region36
    $region35: #{conv_bn_forward.2} parent=5 // pred_region
      %s288 = ssub.s32 %s8, 2
      // Predicated region
      $region37: #{conv_bn_forward.2} parent=35 // pred_check
        %p289 = pneg %p100
      $region38: #{conv_bn_forward.2} parent=35 // pred_check_branch
        %291 = sbr.rel (%p289) target = $region40
      $region39: #{conv_bn_forward.2} parent=35 // pred_region
        %p292 = scmp.lt.s32.totalorder %s19, 1
        %s293 = scalar_select %p292, %s19, 1
        %p294 = scmp.lt.s32.totalorder %s20, 0
        %s295 = scalar_select %p294, %s20, 0
        %s296 = sadd.s32 %s295, %s293
        %s297 = smul.addr %s296, 8
        %s298 = scalar_lea.vmem %s2, %s297
      $region40: #{conv_bn_forward.2} parent=35 // pred_fallthru
        _
    $region36: #{conv_bn_forward.2} parent=5 // pred_fallthru
      _
  $region6: #{conv_bn_forward.2} parent=0 // loop_footer
    %s12 = sadd.s32 1, %s8
  $region7: #{conv_bn_forward.2} parent=0 // loop_footer_branch
    %7 = sbr.rel target = $region3
  $region8: #{conv_bn_forward.2} parent=0 // loop_exit
    _

// kernel: conv_bn_forward.3
$region0: #{conv_bn_forward.3}
  #allocation0 [shape = 'u32[]', space=smem, size = 0x4, offset = 0x4, fixed_abs, tag = 'smem constant byte address 0x4 - core index']
  #allocation1 [shape = 'u32[144,128]{1,0:T(1,128)}', space=vmem, size = 0x12000, scoped, tag = 'internal scratch']
  %s0 = inlined_call_operand.vmem [shape: f32[2,4,256], index: 0, kind: input, shape index: {}]
  %s1 = inlined_call_operand.vmem [shape: f32[8,4], index: 1, kind: input, shape index: {}]
  %s2 = inlined_call_operand.vmem [shape: f32[8,1], index: 2, kind: input, shape index: {}]
  %s3 = inlined_call_operand.vmem [shape: f32[2,8,256], index: 3, kind: output, shape index: {}]
  %s4 = sld [smem:[#allocation0]]
  $region45: #{conv_bn_forward.3} parent=0
    _
  %s6 = ssub.s32 1, %s4
  %s7 = scalar_select 0, %s6, %s4
  loop: start=0, step=1, limit=4
  $region2: #{conv_bn_forward.3} parent=0 // loop_pre_header
    _
  $region3: #{conv_bn_forward.3} parent=0 // loop_header
    %s9 = sphi 0, %s13
    %p10 = scmp.ge.s32.totalorder %s9, 4
    %s16 = sphi 0, %s28
    %s17 = sphi 0, %s24
    %s18 = sphi 0, %s16
    %s19 = sphi 0, %s17
    %s20 = sphi 0, %s18
    %s21 = sphi 0, %s19
    %s33 = sphi 0, %s35
    %s36 = sphi 0, %s33
    %s37 = sphi 0, %s36
    %s53 = sphi 0, %s37
    %s57 = sphi 0, %s57
    %s59 = sphi 0, %s57
    %s60 = sphi 0, %s59
    %s74 = sphi 0, %s60
    %s78 = sphi 0, %s78
    %s80 = sphi 0, %s78
    %s81 = sphi 0, %s80
    %s95 = sphi 0, %s81
    %s103 = sphi 0, %s105
    %s106 = sphi 0, %s103
    %s107 = sphi 0, %s106
    %s123 = sphi 0, %s107
  $region4: #{conv_bn_forward.3} parent=0 // loop_header_branch
    %12 = sbr.rel (%p10) target = $region8
  $region5: #{conv_bn_forward.3} parent=0 // loop_body
    %s14 = ssub.s32 %s9, 1
    %s15 = ssub.s32 %s9, 2
    %s22 = sadd.s32 1, %s17
    %p23 = scmp.ge.s32.totalorder %s22, 1
    %s24 = scalar_select %p23, 0, %s22
    %s25 = sadd.s32 1, %s16
    %s26 = scalar_select %p23, %s25, %s16
    %p27 = scmp.ge.s32.totalorder %s26, 2
    %s28 = scalar_select %p27, 0, %s26
    %s29 = ssub.s32 %s16, %s28
    %s30 = ssub.s32 %s17, %s24
    %s31 = sor.u32 %s29, %s30
    %p32 = scmp.eq.s32.totalorder %s31, 0
    %s34 = sadd.s32 %s33, 1
    %s35 = scalar_select %p32, %s33, %s34
    %p38 = pneg %p32
    %p39 = scmp.eq.s32.totalorder %s9, 1
    %p40 = por %p38, %p39
    %p41 = scmp.ne.s32.totalorder %s33, %s36
    %p42 = scmp.eq.s32.totalorder %s9, 0
    %p43 = por %p41, %p42
    %p44 = scmp.ne.s32.totalorder %s33, %s36
    %p45 = scmp.eq.s32.totalorder %s14, 1
    %p46 = por %p44, %p45
    %p47 = scmp.ne.s32.totalorder %s36, %s37
    %p48 = scmp.eq.s32.totalorder %s14, 0
    %p49 = por %p47, %p48
    %p50 = scmp.ne.s32.totalorder %s36, %s37
    %p51 = scmp.eq.s32.totalorder %s15, 1
    %p52 = por %p50, %p51
    %p54 = scmp.ne.s32.totalorder %s37, %s53
    %p55 = scmp.eq.s32.totalorder %s15, 0
    %p56 = por %p54, %p55
    %s58 = sadd.s32 %s57, 1
    %p61 = scmp.eq.s32.totalorder %s9, 1
    %p62 = scmp.ne.s32.totalorder %s57, %s59
    %p63 = scmp.eq.s32.totalorder %s9, 0
    %p64 = por %p62, %p63
    %p65 = scmp.ne.s32.totalorder %s57, %s59
    %p66 = scmp.eq.s32.totalorder %s14, 1
    %p67 = por %p65, %p66
    %p68 = scmp.ne.s32.totalorder %s59, %s60
    %p69 = scmp.eq.s32.totalorder %s14, 0
    %p70 = por %p68, %p69
    %p71 = scmp.ne.s32.totalorder %s59, %s60
    %p72 = scmp.eq.s32.totalorder %s15, 1
    %p73 = por %p71, %p72
    %p75 = scmp.ne.s32.totalorder %s60, %s74
    %p76 = scmp.eq.s32.totalorder %s15, 0
    %p77 = por %p75, %p76
    %s79 = sadd.s32 %s78, 1
    %p82 = scmp.eq.s32.totalorder %s9, 1
    %p83 = scmp.ne.s32.totalorder %s78, %s80
    %p84 = scmp.eq.s32.totalorder %s9, 0
    %p85 = por %p83, %p84
    %p86 = scmp.ne.s32.totalorder %s78, %s80
    %p87 = scmp.eq.s32.totalorder %s14, 1
    %p88 = por %p86, %p87
    %p89 = scmp.ne.s32.totalorder %s80, %s81
    %p90 = scmp.eq.s32.totalorder %s14, 0
    %p91 = por %p89, %p90
    %p92 = scmp.ne.s32.totalorder %s80, %s81
    %p93 = scmp.eq.s32.totalorder %s15, 1
    %p94 = por %p92, %p93
    %p96 = scmp.ne.s32.totalorder %s81, %s95
    %p97 = scmp.eq.s32.totalorder %s15, 0
    %p98 = por %p96, %p97
    %s99 = ssub.s32 %s16, %s28
    %s100 = ssub.s32 %s17, %s24
    %s101 = sor.u32 %s99, %s100
    %p102 = scmp.eq.s32.totalorder %s101, 0
    %s104 = sadd.s32 %s103, 1
    %s105 = scalar_select %p102, %s103, %s104
    %p108 = pneg %p102
    %p109 = scmp.eq.s32.totalorder %s9, 1
    %p110 = por %p108, %p109
    %p111 = scmp.ne.s32.totalorder %s103, %s106
    %p112 = scmp.eq.s32.totalorder %s9, 0
    %p113 = por %p111, %p112
    %p114 = scmp.ne.s32.totalorder %s103, %s106
    %p115 = scmp.eq.s32.totalorder %s14, 1
    %p116 = por %p114, %p115
    %p117 = scmp.ne.s32.totalorder %s106, %s107
    %p118 = scmp.eq.s32.totalorder %s14, 0
    %p119 = por %p117, %p118
    %p120 = scmp.ne.s32.totalorder %s106, %s107
    %p121 = scmp.eq.s32.totalorder %s15, 1
    %p122 = por %p120, %p121
    %p124 = scmp.ne.s32.totalorder %s107, %s123
    %p125 = scmp.eq.s32.totalorder %s15, 0
    %p126 = por %p124, %p125
    %p127 = scmp.le.s32.totalorder 1, %s9
    %p128 = scmp.lt.s32.totalorder %s9, 3
    %p129 = pnand %p127, %p128
    %p130 = pneg %p129
    // Predicated region
    $region9: #{conv_bn_forward.3} parent=5 // pred_check
      _
    $region10: #{conv_bn_forward.3} parent=5 // pred_check_branch
      %132 = sbr.rel (%p129) target = $region12
    $region11: #{conv_bn_forward.3} parent=5 // pred_region
      %s133 = ssub.s32 %s9, 1
      // Predicated region
      $region13: #{conv_bn_forward.3} parent=11 // pred_check
        %p134 = pneg %p70
      $region14: #{conv_bn_forward.3} parent=11 // pred_check_branch
        %136 = sbr.rel (%p134) target = $region16
      $region15: #{conv_bn_forward.3} parent=11 // pred_region
        _
      $region16: #{conv_bn_forward.3} parent=11 // pred_fallthru
        _
      // Predicated region
      $region17: #{conv_bn_forward.3} parent=11 // pred_check
        %p137 = pneg %p91
      $region18: #{conv_bn_forward.3} parent=11 // pred_check_branch
        %139 = sbr.rel (%p137) target = $region20
      $region19: #{conv_bn_forward.3} parent=11 // pred_region
        _
      $region20: #{conv_bn_forward.3} parent=11 // pred_fallthru
        _
    $region12: #{conv_bn_forward.3} parent=5 // pred_fallthru
      _
    %p140 = scmp.lt.s32.totalorder %s9, 2
    // Predicated region
    $region21: #{conv_bn_forward.3} parent=5 // pred_check
      %p141 = pneg %p140
    $region22: #{conv_bn_forward.3} parent=5 // pred_check_branch
      %143 = sbr.rel (%p141) target = $region24
    $region23: #{conv_bn_forward.3} parent=5 // pred_region
      // Predicated region
      $region25: #{conv_bn_forward.3} parent=23 // pred_check
        %p144 = pneg %p43
      $region26: #{conv_bn_forward.3} parent=23 // pred_check_branch
        %146 = sbr.rel (%p144) target = $region28
      $region27: #{conv_bn_forward.3} parent=23 // pred_region
        %s147 = smul.u32 2, %s17
        %p148 = scmp.lt.s32.totalorder %s16, 1
        %s149 = scalar_select %p148, %s16, 1
        %p150 = scmp.lt.s32.totalorder %s147, 1
        %s151 = scalar_select %p150, %s147, 1
        %s152 = smul.addr %s149, 2
        %s153 = sadd.s32 %s151, %s152
        %s154 = smul.addr %s153, 4
        %s155 = scalar_lea.vmem %s0, %s154
        %s156 = smul.u32 2, %s17
      $region28: #{conv_bn_forward.3} parent=23 // pred_fallthru
        _
    $region24: #{conv_bn_forward.3} parent=5 // pred_fallthru
      _
    %p157 = scmp.le.s32.totalorder 1, %s9
    %p158 = scmp.lt.s32.totalorder %s9, 3
    %p159 = pnand %p157, %p158
    %p160 = pneg %p159
    // Predicated region
    $region29: #{conv_bn_forward.3} parent=5 // pred_check
      _
    $region30: #{conv_bn_forward.3} parent=5 // pred_check_branch
      %162 = sbr.rel (%p159) target = $region32
    $region31: #{conv_bn_forward.3} parent=5 // pred_region
      %s163 = ssub.s32 %s9, 1
      %s164 = smul.u32 2, %s19
      %p165 = scmp.lt.s32.totalorder %s18, 1
      %s166 = scalar_select %p165, %s18, 1
      %p167 = scmp.lt.s32.totalorder %s164, 1
      %s168 = scalar_select %p167, %s164, 1
      %s169 = smul.addr %s166, 2
      %s170 = sadd.s32 %s168, %s169
      %s171 = smul.addr %s170, 4
      %s172 = scalar_lea.vmem %s0, %s171
      %p173 = pneg %p49
      %p174 = pneg %p46
      %p175 = pneg %p70
      %p176 = pneg %p67
      %p177 = pneg %p91
      %p178 = pneg %p88
      %p179 = pneg %p119
      %p180 = pneg %p116
      %s181 = smul.u32 2, %s19
      %p182 = scmp.lt.s32.totalorder %s18, 1
      %s183 = scalar_select %p182, %s18, 1
      %p184 = scmp.lt.s32.totalorder %s181, 1
      %s185 = scalar_select %p184, %s181, 1
      %s186 = smul.addr %s183, 2
      %s187 = sadd.s32 %s185, %s186
      %s188 = smul.addr %s187, 8
      %s189 = scalar_lea.vmem %s3, %s188
      %s190 = smul.u32 2, %s19
      %p191 = scmp.lt.s32.totalorder %s18, 1
      %s192 = scalar_select %p191, %s18, 1
      %p193 = scmp.lt.s32.totalorder %s190, 1
      %s194 = scalar_select %p193, %s190, 1
      %s195 = smul.addr %s192, 2
      %s196 = sadd.s32 %s194, %s195
      %s197 = smul.addr %s196, 4
      %s198 = scalar_lea.vmem %s0, %s197
      %s199 = smul.u32 2, %s19
      %s200 = smul.u32 2, %s19
      %p201 = scmp.lt.s32.totalorder %s18, 1
      %s202 = scalar_select %p201, %s18, 1
      %p203 = scmp.lt.s32.totalorder %s200, 1
      %s204 = scalar_select %p203, %s200, 1
      %s205 = smul.addr %s202, 2
      %s206 = sadd.s32 %s204, %s205
      %s207 = smul.addr %s206, 8
      %s208 = scalar_lea.vmem %s3, %s207
      %s209 = smul.u32 2, %s19
      %v210 = vld [vmem:[%s198] sm:$0xff]
      %v211 = vld [vmem:[%s1] sm:$0xff]
      %v212 = vld [vmem:[%s2] sm:$0xff]
      %214 = vset.pattern.permute.xlu0 0
      %215 = vperm.xlu0 %214, %v212
      %v216 = vpop.permute.xlu0 %215
      %v219 = vcombine.high %v210, %v210
      %vm220 = vcmask 31744
      %v222 = vsel %vm220, %v211, 0
      %vm224 = vcmask 1043456
      %v225 = vsel %vm224, %v210, 0
      %v227 = vsel %vm224, %v219, 0
      %229 = vmatprep.subr.mxu0 %v227
      %230 = vmatpush1.msra.mxu0 %v225
      %231 = vmatprep.subr.mxu0 0.0
      %232 = vmatpush1.msra.mxu0 0.0
      %233 = vmatprep.subr.mxu0 0.0
      %234 = vmatpush1.msra.mxu0 0.0
      %235 = vmatprep.subr.mxu0 0.0
      %236 = vmatpush1.msra.mxu0 0.0
      %237 = vmatprep.subr.mxu0 0.0
      %238 = vmatpush1.msra.mxu0 0.0
      %239 = vmatprep.subr.mxu0 0.0
      %240 = vmatpush1.msra.mxu0 0.0
      %241 = vmatprep.subr.mxu0 0.0
      %242 = vmatpush1.msra.mxu0 0.0
      %243 = vmatprep.subr.mxu0 0.0
      %244 = vmatpush1.msra.mxu0 0.0
      %245 = vmatprep.subr.mxu0 0.0
      %246 = vmatpush1.msra.mxu0 0.0
      %247 = vmatprep.subr.mxu0 0.0
      %248 = vmatpush1.msra.mxu0 0.0
      %249 = vmatprep.subr.mxu0 0.0
      %250 = vmatpush1.msra.mxu0 0.0
      %251 = vmatprep.subr.mxu0 0.0
      %252 = vmatpush1.msra.mxu0 0.0
      %253 = vmatprep.subr.mxu0 0.0
      %254 = vmatpush1.msra.mxu0 0.0
      %255 = vmatprep.subr.mxu0 0.0
      %256 = vmatpush1.msra.mxu0 0.0
      %257 = vmatprep.subr.mxu0 0.0
      %258 = vmatpush1.msra.mxu0 0.0
      %259 = vmatprep.subr.mxu0 0.0
      %260 = vmatpush1.msra.mxu0 0.0
      %261 = vmatprep.subr.mxu0 0.0
      %262 = vmatpush1.msra.mxu0 0.0
      %263 = vmatprep.subr.mxu0 0.0
      %264 = vmatpush1.msra.mxu0 0.0
      %265 = vmatprep.subr.mxu0 0.0
      %266 = vmatpush1.msra.mxu0 0.0
      %267 = vmatprep.subr.mxu0 0.0
      %268 = vmatpush1.msra.mxu0 0.0
      %269 = vmatprep.subr.mxu0 0.0
      %270 = vmatpush1.msra.mxu0 0.0
      %271 = vmatprep.subr.mxu0 0.0
      %272 = vmatpush1.msra.mxu0 0.0
      %273 = vmatprep.subr.mxu0 0.0
      %274 = vmatpush1.msra.mxu0 0.0
      %275 = vmatprep.subr.mxu0 0.0
      %276 = vmatpush1.msra.mxu0 0.0
      %277 = vmatprep.subr.mxu0 0.0
      %278 = vmatpush1.msra.mxu0 0.0
      %279 = vmatprep.subr.mxu0 0.0
      %280 = vmatpush1.msra.mxu0 0.0
      %281 = vmatprep.subr.mxu0 0.0
      %282 = vmatpush1.msra.mxu0 0.0
      %283 = vmatprep.subr.mxu0 0.0
      %284 = vmatpush1.msra.mxu0 0.0
      %285 = vmatprep.subr.mxu0 0.0
      %286 = vmatpush1.msra.mxu0 0.0
      %287 = vmatprep.subr.mxu0 0.0
      %288 = vmatpush1.msra.mxu0 0.0
      %289 = vmatprep.subr.mxu0 0.0
      %290 = vmatpush1.msra.mxu0 0.0
      %291 = vmatprep.subr.mxu0 0.0
      %292 = vmatpush1.msra.mxu0 0.0
      %293 = vmatprep.mubr.f32.mxu0 0.0
      %294 = vmatmul.mubr.f32.gmra.mrb[0].mxu0 %v222
      %v295 = vpop.f32.mrb[0].mxu0
      %v296 = vadd.f32 %v216, %v295
      %v297 = vpop.f32.mrb[0].mxu0
      %v298 = vadd.f32 %v216, %v297
      %299 = vdwg.mxu0
      %300 = vst [vmem:[%s208] sm:$0xff] %v296
      %301 = vst [vmem:[%s208 + $0x8] sm:$0xff] %v298
      %s302 = smul.u32 2, %s19
      %p303 = scmp.lt.s32.totalorder %s18, 1
      %s304 = scalar_select %p303, %s18, 1
      %p305 = scmp.lt.s32.totalorder %s302, 1
      %s306 = scalar_select %p305, %s302, 1
      %s307 = smul.addr %s304, 2
      %s308 = sadd.s32 %s306, %s307
      %s309 = smul.addr %s308, 8
      %s310 = scalar_lea.vmem %s3, %s309
      // Predicated region
      $region33: #{conv_bn_forward.3} parent=31 // pred_check
        %p311 = pneg %p116
      $region34: #{conv_bn_forward.3} parent=31 // pred_check_branch
        %313 = sbr.rel (%p311) target = $region36
      $region35: #{conv_bn_forward.3} parent=31 // pred_region
        %s314 = smul.u32 2, %s19
      $region36: #{conv_bn_forward.3} parent=31 // pred_fallthru
        _
    $region32: #{conv_bn_forward.3} parent=5 // pred_fallthru
      _
    %p315 = scmp.le.s32.totalorder 2, %s9
    // Predicated region
    $region37: #{conv_bn_forward.3} parent=5 // pred_check
      %p316 = pneg %p315
    $region38: #{conv_bn_forward.3} parent=5 // pred_check_branch
      %318 = sbr.rel (%p316) target = $region40
    $region39: #{conv_bn_forward.3} parent=5 // pred_region
      %s319 = ssub.s32 %s9, 2
      // Predicated region
      $region41: #{conv_bn_forward.3} parent=39 // pred_check
        %p320 = pneg %p122
      $region42: #{conv_bn_forward.3} parent=39 // pred_check_branch
        %322 = sbr.rel (%p320) target = $region44
      $region43: #{conv_bn_forward.3} parent=39 // pred_region
        %s323 = smul.u32 2, %s21
        %p324 = scmp.lt.s32.totalorder %s20, 1
        %s325 = scalar_select %p324, %s20, 1
        %p326 = scmp.lt.s32.totalorder %s323, 1
        %s327 = scalar_select %p326, %s323, 1
        %s328 = smul.addr %s325, 2
        %s329 = sadd.s32 %s327, %s328
        %s330 = smul.addr %s329, 8
        %s331 = scalar_lea.vmem %s3, %s330
      $region44: #{conv_bn_forward.3} parent=39 // pred_fallthru
        _
    $region40: #{conv_bn_forward.3} parent=5 // pred_fallthru
      _
  $region6: #{conv_bn_forward.3} parent=0 // loop_footer
    %s13 = sadd.s32 1, %s9
  $region7: #{conv_bn_forward.3} parent=0 // loop_footer_branch
    %8 = sbr.rel target = $region3
  $region8: #{conv_bn_forward.3} parent=0 // loop_exit
    _

</llo_original>
